<compile_context>
chip_gen: v5e
topology: v5e:2x2
jax: 0.10.0
libtpu: 0.0.40
codegen_flags: <defaults>
</compile_context>

<pallas_src>
from functools import partial

import jax
import jax.numpy as jnp
import numpy as np
from jax.experimental import pallas as pl
from jax.experimental.pallas import tpu as pltpu

_LANES = 512      # lane-dense minor dim (multiple of 128)
_MAX_TM = 1024    # max rows per grid step (multiple of 8)


def _val_loss_kernel(rows_valid, blocks_per_core,
                     p_ref, t_ref, part_ref,
                     sq_acc, abs_acc, err_acc):
    c = pl.program_id(0)          # core-split axis ("parallel")
    j = pl.program_id(1)          # streaming reduction axis ("arbitrary")
    tm, lanes = p_ref.shape

    # init per-core accumulators on the first reduction step
    @pl.when(j == 0)
    def _():
        sq_acc[...] = jnp.zeros_like(sq_acc)
        abs_acc[...] = jnp.zeros_like(abs_acc)
        err_acc[...] = jnp.zeros_like(err_acc)

    # logical (unclamped) first row of this block in the (R, LANES) slab
    row0 = (c * blocks_per_core + j) * tm
    sub_iota = jax.lax.broadcasted_iota(jnp.int32, (8, lanes), 0)

    # stream the tile in 8-row groups: loads + elementwise adds only; the
    # cross-sublane / cross-lane reductions are deferred to the finalize branch.
    @pl.loop(0, tm // 8)
    def _(g):
        r0 = pl.multiple_of(g * 8, 8)
        p = p_ref[pl.ds(r0, 8), :].astype(jnp.float32)
        t = t_ref[pl.ds(r0, 8), :].astype(jnp.float32)
        d = p - t
        # mask rows past the real data (ragged tail / core-split overrun)
        limit = rows_valid - (row0 + r0)
        d = jnp.where(sub_iota < limit, d, 0.0)
        sq_acc[...] += d * d
        abs_acc[...] += jnp.abs(d)
        err_acc[...] += d

    # finalize: reduce once, emit raw per-core partial sums in lanes 0..2
    @pl.when(j == pl.num_programs(1) - 1)
    def _():
        s_sq = jnp.sum(sq_acc[...])
        s_abs = jnp.sum(abs_acc[...])
        s_err = jnp.sum(err_acc[...])
        lane = jax.lax.broadcasted_iota(jnp.int32, (1, 1, 128), 2)
        part_ref[...] = (jnp.where(lane == 0, s_sq, 0.0)
                         + jnp.where(lane == 1, s_abs, 0.0)
                         + jnp.where(lane == 2, s_err, 0.0))


def val_loss(preds, labels, weights=1.0):
    """JAX/Pallas equivalent of ValLoss(num_outputs, 'MSE').forward(preds, labels).

    preds : (B, num_outputs, H, W)   labels : (B, H, W)
    Returns dict of scalar f32: {'loss', 'RMSE', 'MAE', 'ME'}.
    """
    pred0 = preds[:, 0]                      # (B, H, W) channel-0 slice
    # TODO(synk): for W % 128 == 0 the channel slice could be folded into the
    # BlockSpec (squeezed channel dim) to avoid this strided-gather pass.
    assert pred0.shape == labels.shape

    n_elems = int(np.prod(pred0.shape))      # true element count for the mean
    pflat = pred0.reshape(-1)
    tflat = labels.reshape(-1)

    gran = 8 * _LANES
    n_pad = (-n_elems) % gran
    if n_pad:
        # small tail pad only (zeros contribute 0 to every sum)
        pflat = jnp.pad(pflat, (0, n_pad))
        tflat = jnp.pad(tflat, (0, n_pad))
    rows = (n_elems + n_pad) // _LANES       # multiple of 8
    p2 = pflat.reshape(rows, _LANES)
    t2 = tflat.reshape(rows, _LANES)

    tm = min(_MAX_TM, rows)
    nblk = -(-rows // tm)                    # total row blocks
    nblk_half = (nblk + 1) // 2              # blocks per TensorCore (v7x split)

    def in_map(c, j):
        # clamp so the DMA never targets a fully out-of-range block; the kernel's
        # row mask (based on the unclamped logical row) discards the duplicates.
        return (jnp.minimum(c * nblk_half + j, nblk - 1), 0)

    kernel = partial(_val_loss_kernel, rows, nblk_half)

    parts = pl.pallas_call(
        kernel,
        out_shape=jax.ShapeDtypeStruct((2, 1, 128), jnp.float32),
        grid_spec=pltpu.PrefetchScalarGridSpec(
            num_scalar_prefetch=0,
            grid=(2, nblk_half),
            in_specs=[
                pl.BlockSpec((tm, _LANES), in_map),
                pl.BlockSpec((tm, _LANES), in_map),
            ],
            out_specs=pl.BlockSpec((1, 1, 128), lambda c, j: (c, 0, 0)),
            scratch_shapes=[
                pltpu.VMEM((8, _LANES), jnp.float32),   # sum of d^2
                pltpu.VMEM((8, _LANES), jnp.float32),   # sum of |d|
                pltpu.VMEM((8, _LANES), jnp.float32),   # sum of d
            ],
        ),
        compiler_params=pltpu.CompilerParams(
            dimension_semantics=("parallel", "arbitrary")),
    )(p2, t2)

    # combine the two per-core partials; tiny scalar epilogue in plain JAX
    sums = jnp.sum(parts[:, 0, :3], axis=0)
    scale = jnp.float32(weights) / jnp.float32(n_elems)
    mse = sums[0] * scale                    # mean(weights * d^2)
    # TODO(synk): elementwise `weights` arrays are not supported; ValLoss.forward
    # always uses the scalar default weights=1.
    return {
        "loss": mse,                                 # MSE
        "RMSE": jnp.sqrt(mse),                       # sqrt(mean(weights * d^2))
        "MAE": sums[1] * scale,                      # mean(weights * |d|)
        "ME": sums[2] * scale,                       # mean(weights * d)
    }


if __name__ == "__main__":
    key = jax.random.PRNGKey(0)
    k1, k2 = jax.random.split(key)

    B, C, H, W = 2, 4, 16, 16          # num_outputs = 4 (only channel 0 is used)
    preds = jax.random.normal(k1, (B, C, H, W), dtype=jnp.float32)
    labels = jax.random.normal(k2, (B, H, W), dtype=jnp.float32)

    losses = val_loss(preds, labels)
    losses = jax.tree_util.tree_map(jax.block_until_ready, losses)

    # pure-JAX reference check
    d = preds[:, 0] - labels
    ref = {
        "loss": jnp.mean(d * d),
        "RMSE": jnp.sqrt(jnp.mean(d * d)),
        "MAE": jnp.mean(jnp.abs(d)),
        "ME": jnp.mean(d),
    }
    for k in ref:
        np.testing.assert_allclose(np.asarray(losses[k]), np.asarray(ref[k]),
                                   rtol=1e-5, atol=1e-6)

    print("KERNEL_OK")
</pallas_src>

<mosaic_0001>
module attributes {stable_mosaic.version = 11 : i64} {
  func.func @_val_loss_kernel(%arg0: i32, %arg1: i32, %arg2: memref<8x512xf32, #tpu.memory_space<vmem>>, %arg3: memref<8x512xf32, #tpu.memory_space<vmem>>, %arg4: memref<1x1x128xf32, #tpu.memory_space<vmem>>, %arg5: memref<8x512xf32, #tpu.memory_space<vmem>>, %arg6: memref<8x512xf32, #tpu.memory_space<vmem>>, %arg7: memref<8x512xf32, #tpu.memory_space<vmem>>) attributes {dimension_semantics = [#tpu.dimension_semantics<parallel>, #tpu.dimension_semantics<arbitrary>], iteration_bounds = array<i64: 2, 1>, scalar_prefetch = 0 : i64, scratch_operands = 3 : i64, tpu.core_type = #tpu.core_type<tc>, window_params = [{transform_indices = @transform_0, window_bounds = array<i64: 8, 512>}, {transform_indices = @transform_1, window_bounds = array<i64: 8, 512>}, {transform_indices = @transform_2, window_bounds = array<i64: 1, 1, 128>}]} {
    %c0_i32 = arith.constant 0 : i32
    %0 = arith.cmpi eq, %arg1, %c0_i32 : i32
    %1 = arith.extui %0 : i1 to i32
    %c0_i32_0 = arith.constant 0 : i32
    %2 = arith.cmpi ne, %1, %c0_i32_0 : i32
    scf.if %2 {
      %cst_22 = arith.constant 0.000000e+00 : f32
      %36 = vector.broadcast %cst_22 : f32 to vector<8x512xf32>
      %c0_23 = arith.constant 0 : index
      %c0_24 = arith.constant 0 : index
      %37 = vector.load %arg5[%c0_23, %c0_24] : memref<8x512xf32, #tpu.memory_space<vmem>>, vector<8x512xf32>
      tpu.vector_store %arg5[%c0_23, %c0_24], %36 {strides = array<i32>} : memref<8x512xf32, #tpu.memory_space<vmem>>, vector<8x512xf32>,
      %cst_25 = arith.constant 0.000000e+00 : f32
      %38 = vector.broadcast %cst_25 : f32 to vector<8x512xf32>
      %c0_26 = arith.constant 0 : index
      %c0_27 = arith.constant 0 : index
      %39 = vector.load %arg6[%c0_26, %c0_27] : memref<8x512xf32, #tpu.memory_space<vmem>>, vector<8x512xf32>
      tpu.vector_store %arg6[%c0_26, %c0_27], %38 {strides = array<i32>} : memref<8x512xf32, #tpu.memory_space<vmem>>, vector<8x512xf32>,
      %cst_28 = arith.constant 0.000000e+00 : f32
      %40 = vector.broadcast %cst_28 : f32 to vector<8x512xf32>
      %c0_29 = arith.constant 0 : index
      %c0_30 = arith.constant 0 : index
      %41 = vector.load %arg7[%c0_29, %c0_30] : memref<8x512xf32, #tpu.memory_space<vmem>>, vector<8x512xf32>
      tpu.vector_store %arg7[%c0_29, %c0_30], %40 {strides = array<i32>} : memref<8x512xf32, #tpu.memory_space<vmem>>, vector<8x512xf32>,
    } else {
    }
    %c1_i32 = arith.constant 1 : i32
    %3 = arith.muli %arg0, %c1_i32 : i32
    %4 = arith.addi %3, %arg1 : i32
    %c8_i32 = arith.constant 8 : i32
    %5 = arith.muli %4, %c8_i32 : i32
    %6 = tpu.iota {dimensions = array<i32: 0>} : vector<8x512xi32>
    %c0_i32_1 = arith.constant 0 : i32
    %c1_i32_2 = arith.constant 1 : i32
    %7 = arith.muli %c0_i32_1, %c1_i32_2 : i32
    %c0_i32_3 = arith.constant 0 : i32
    %8 = arith.addi %c0_i32_3, %7 : i32
    %c8_i32_4 = arith.constant 8 : i32
    %9 = arith.muli %8, %c8_i32_4 : i32
    %10 = tpu.assume_multiple %9, 8 : i32
    %11 = arith.index_cast %10 : i32 to index
    %c0 = arith.constant 0 : index
    %12 = vector.load %arg2[%11, %c0] : memref<8x512xf32, #tpu.memory_space<vmem>>, vector<8x512xf32>
    %13 = arith.index_cast %10 : i32 to index
    %c0_5 = arith.constant 0 : index
    %14 = vector.load %arg3[%13, %c0_5] : memref<8x512xf32, #tpu.memory_space<vmem>>, vector<8x512xf32>
    %15 = arith.subf %12, %14 : vector<8x512xf32>
    %16 = arith.addi %5, %10 : i32
    %c8_i32_6 = arith.constant 8 : i32
    %17 = arith.subi %c8_i32_6, %16 : i32
    %18 = vector.broadcast %17 : i32 to vector<8x512xi32>
    %19 = arith.cmpi slt, %6, %18 : vector<8x512xi32>
    %cst = arith.constant 0.000000e+00 : f32
    %20 = vector.broadcast %cst : f32 to vector<8x512xf32>
    %21 = arith.select %19, %15, %20 : vector<8x512xi1>, vector<8x512xf32>
    %c0_7 = arith.constant 0 : index
    %c0_8 = arith.constant 0 : index
    %22 = vector.load %arg5[%c0_7, %c0_8] : memref<8x512xf32, #tpu.memory_space<vmem>>, vector<8x512xf32>
    %23 = arith.mulf %21, %21 : vector<8x512xf32>
    %24 = arith.addf %22, %23 : vector<8x512xf32>
    %c0_9 = arith.constant 0 : index
    %c0_10 = arith.constant 0 : index
    %25 = vector.load %arg5[%c0_9, %c0_10] : memref<8x512xf32, #tpu.memory_space<vmem>>, vector<8x512xf32>
    tpu.vector_store %arg5[%c0_9, %c0_10], %24 {strides = array<i32>} : memref<8x512xf32, #tpu.memory_space<vmem>>, vector<8x512xf32>,
    %c0_11 = arith.constant 0 : index
    %c0_12 = arith.constant 0 : index
    %26 = vector.load %arg6[%c0_11, %c0_12] : memref<8x512xf32, #tpu.memory_space<vmem>>, vector<8x512xf32>
    %27 = math.absf %21 : vector<8x512xf32>
    %28 = arith.addf %26, %27 : vector<8x512xf32>
    %c0_13 = arith.constant 0 : index
    %c0_14 = arith.constant 0 : index
    %29 = vector.load %arg6[%c0_13, %c0_14] : memref<8x512xf32, #tpu.memory_space<vmem>>, vector<8x512xf32>
    tpu.vector_store %arg6[%c0_13, %c0_14], %28 {strides = array<i32>} : memref<8x512xf32, #tpu.memory_space<vmem>>, vector<8x512xf32>,
    %c0_15 = arith.constant 0 : index
    %c0_16 = arith.constant 0 : index
    %30 = vector.load %arg7[%c0_15, %c0_16] : memref<8x512xf32, #tpu.memory_space<vmem>>, vector<8x512xf32>
    %31 = arith.addf %30, %21 : vector<8x512xf32>
    %c0_17 = arith.constant 0 : index
    %c0_18 = arith.constant 0 : index
    %32 = vector.load %arg7[%c0_17, %c0_18] : memref<8x512xf32, #tpu.memory_space<vmem>>, vector<8x512xf32>
    tpu.vector_store %arg7[%c0_17, %c0_18], %31 {strides = array<i32>} : memref<8x512xf32, #tpu.memory_space<vmem>>, vector<8x512xf32>,
    %c1_i32_19 = arith.constant 1 : i32
    %c0_i32_20 = arith.constant 0 : i32
    %33 = arith.cmpi eq, %arg1, %c0_i32_20 : i32
    %34 = arith.extui %33 : i1 to i32
    %c0_i32_21 = arith.constant 0 : i32
    %35 = arith.cmpi ne, %34, %c0_i32_21 : i32
    scf.if %35 {
      %c0_22 = arith.constant 0 : index
      %c0_23 = arith.constant 0 : index
      %36 = vector.load %arg5[%c0_22, %c0_23] : memref<8x512xf32, #tpu.memory_space<vmem>>, vector<8x512xf32>
      %37 = vector.shape_cast %36 : vector<8x512xf32> to vector<1x8x512xf32>
      %cst_24 = arith.constant dense<0.000000e+00> : vector<1xf32>
      %38 = vector.multi_reduction <add>, %37, %cst_24 [1, 2] : vector<1x8x512xf32> to vector<1xf32>
      %39 = vector.shape_cast %38 : vector<1xf32> to vector<1x1x1xf32>
      %40 = vector.extract %39[0, 0, 0] : f32 from vector<1x1x1xf32>
      %c0_25 = arith.constant 0 : index
      %c0_26 = arith.constant 0 : index
      %41 = vector.load %arg6[%c0_25, %c0_26] : memref<8x512xf32, #tpu.memory_space<vmem>>, vector<8x512xf32>
      %42 = vector.shape_cast %41 : vector<8x512xf32> to vector<1x8x512xf32>
      %cst_27 = arith.constant dense<0.000000e+00> : vector<1xf32>
      %43 = vector.multi_reduction <add>, %42, %cst_27 [1, 2] : vector<1x8x512xf32> to vector<1xf32>
      %44 = vector.shape_cast %43 : vector<1xf32> to vector<1x1x1xf32>
      %45 = vector.extract %44[0, 0, 0] : f32 from vector<1x1x1xf32>
      %c0_28 = arith.constant 0 : index
      %c0_29 = arith.constant 0 : index
      %46 = vector.load %arg7[%c0_28, %c0_29] : memref<8x512xf32, #tpu.memory_space<vmem>>, vector<8x512xf32>
      %47 = vector.shape_cast %46 : vector<8x512xf32> to vector<1x8x512xf32>
      %cst_30 = arith.constant dense<0.000000e+00> : vector<1xf32>
      %48 = vector.multi_reduction <add>, %47, %cst_30 [1, 2] : vector<1x8x512xf32> to vector<1xf32>
      %49 = vector.shape_cast %48 : vector<1xf32> to vector<1x1x1xf32>
      %50 = vector.extract %49[0, 0, 0] : f32 from vector<1x1x1xf32>
      %51 = tpu.iota {dimensions = array<i32: 2>} : vector<1x1x128xi32>
      %c0_i32_31 = arith.constant 0 : i32
      %52 = vector.broadcast %c0_i32_31 : i32 to vector<1x1x128xi32>
      %53 = arith.cmpi eq, %51, %52 : vector<1x1x128xi32>
      %cst_32 = arith.constant 0.000000e+00 : f32
      %54 = vector.broadcast %40 : f32 to vector<1x1x128xf32>
      %55 = vector.broadcast %cst_32 : f32 to vector<1x1x128xf32>
      %56 = arith.select %53, %54, %55 : vector<1x1x128xi1>, vector<1x1x128xf32>
      %c1_i32_33 = arith.constant 1 : i32
      %57 = vector.broadcast %c1_i32_33 : i32 to vector<1x1x128xi32>
      %58 = arith.cmpi eq, %51, %57 : vector<1x1x128xi32>
      %cst_34 = arith.constant 0.000000e+00 : f32
      %59 = vector.broadcast %45 : f32 to vector<1x1x128xf32>
      %60 = vector.broadcast %cst_34 : f32 to vector<1x1x128xf32>
      %61 = arith.select %58, %59, %60 : vector<1x1x128xi1>, vector<1x1x128xf32>
      %62 = arith.addf %56, %61 : vector<1x1x128xf32>
      %c2_i32 = arith.constant 2 : i32
      %63 = vector.broadcast %c2_i32 : i32 to vector<1x1x128xi32>
      %64 = arith.cmpi eq, %51, %63 : vector<1x1x128xi32>
      %cst_35 = arith.constant 0.000000e+00 : f32
      %65 = vector.broadcast %50 : f32 to vector<1x1x128xf32>
      %66 = vector.broadcast %cst_35 : f32 to vector<1x1x128xf32>
      %67 = arith.select %64, %65, %66 : vector<1x1x128xi1>, vector<1x1x128xf32>
      %68 = arith.addf %62, %67 : vector<1x1x128xf32>
      %c0_36 = arith.constant 0 : index
      %c0_37 = arith.constant 0 : index
      %c0_38 = arith.constant 0 : index
      %69 = vector.load %arg4[%c0_36, %c0_37, %c0_38] : memref<1x1x128xf32, #tpu.memory_space<vmem>>, vector<1x1x128xf32>
      tpu.vector_store %arg4[%c0_36, %c0_37, %c0_38], %68 {strides = array<i32>} : memref<1x1x128xf32, #tpu.memory_space<vmem>>, vector<1x1x128xf32>,
    } else {
    }
    return
  }
  func.func @transform_0(%arg0: i32, %arg1: i32) -> (i32, i32) {
    %c1_i32 = arith.constant 1 : i32
    %0 = arith.muli %arg0, %c1_i32 : i32
    %1 = arith.addi %0, %arg1 : i32
    %c0_i32 = arith.constant 0 : i32
    %2 = arith.minsi %1, %c0_i32 : i32
    %c0_i32_0 = arith.constant 0 : i32
    %c0_i32_1 = arith.constant 0 : i32
    return %2, %c0_i32_0 : i32, i32
  }
  func.func @transform_1(%arg0: i32, %arg1: i32) -> (i32, i32) {
    %c1_i32 = arith.constant 1 : i32
    %0 = arith.muli %arg0, %c1_i32 : i32
    %1 = arith.addi %0, %arg1 : i32
    %c0_i32 = arith.constant 0 : i32
    %2 = arith.minsi %1, %c0_i32 : i32
    %c0_i32_0 = arith.constant 0 : i32
    %c0_i32_1 = arith.constant 0 : i32
    return %2, %c0_i32_0 : i32, i32
  }
  func.func @transform_2(%arg0: i32, %arg1: i32) -> (i32, i32, i32) {
    %c0_i32 = arith.constant 0 : i32
    %c0_i32_0 = arith.constant 0 : i32
    %c0_i32_1 = arith.constant 0 : i32
    return %arg0, %c0_i32, %c0_i32_0 : i32, i32, i32
  }
}

</mosaic_0001>

<llo_original>
// kernel: tpu_custom_call.1
$region0: #{tpu_custom_call.1}
  #allocation0 [shape = 'u32[]', space=smem, size = 0x4, offset = 0x4, fixed_abs, tag = 'smem constant byte address 0x4 - core index']
  #allocation1 [shape = 'u32[72,128]{1,0:T(1,128)}', space=vmem, size = 0x9000, scoped, tag = 'internal scratch']
  #allocation2 [shape = 'f32[8,512]{1,0:T(8,128)}', space=vmem, size = 0x4000, scoped, tag = 'scratch operand']
  #allocation3 [shape = 'f32[8,512]{1,0:T(8,128)}', space=vmem, size = 0x4000, scoped, tag = 'scratch operand']
  #allocation4 [shape = 'f32[8,512]{1,0:T(8,128)}', space=vmem, size = 0x4000, scoped, tag = 'scratch operand']
  %s0 = inlined_call_operand.hbm [shape: f32[8,512], index: 0, kind: input, shape index: {}]
  %s1 = inlined_call_operand.hbm [shape: f32[8,512], index: 1, kind: input, shape index: {}]
  %s2 = inlined_call_operand.hbm [shape: f32[2,1,128], index: 2, kind: output, shape index: {}]
  %s3 = sld [smem:[#allocation0]]
  $region57: #{tpu_custom_call.1} parent=0
    _
  %s5 = ssub.s32 1, %s3
  %s6 = scalar_select 0, %s5, %s3
  $region1: #{tpu_custom_call.1} parent=0
    #allocation5 [shape = 'u8[32768]{0}', space=vmem, size = 0x8000, scoped, tag = 'input window, operand 0']
    #allocation6 [shape = 's32[2]{0}', space=sflag, size = 0x8, scoped, tag = 'scoped memory for tpu_custom_call.1']
    #allocation7 [shape = 's32[2]{0}', space=sflag, size = 0x8, scoped, tag = 'scoped memory for tpu_custom_call.1']
    #allocation8 [shape = 'u8[32768]{0}', space=vmem, size = 0x8000, scoped, tag = 'input window, operand 1']
    #allocation9 [shape = 's32[2]{0}', space=sflag, size = 0x8, scoped, tag = 'scoped memory for tpu_custom_call.1']
    #allocation10 [shape = 'u8[1024]{0}', space=vmem, size = 0x400, scoped, tag = 'output window, operand 0']
    %7 = vsyncpa [#allocation6], 0
    %s8 = scalar_lea.sflag [#allocation6], 1
    %9 = vsyncpa %s8, 0
    %10 = vsyncpa [#allocation9], 0
    %s11 = scalar_lea.sflag [#allocation9], 1
    %12 = vsyncpa %s11, 0
    %13 = vsyncpa [#allocation7], 0
    %s14 = scalar_lea.sflag [#allocation7], 1
    %15 = vsyncpa %s14, 0
    loop: start=0, step=1, limit=4
    $region2: #{tpu_custom_call.1} parent=1 // loop_pre_header
      _
    $region3: #{tpu_custom_call.1} parent=1 // loop_header
      %s17 = sphi 0, %s21
      %p18 = scmp.ge.s32.totalorder %s17, 4
      %s24 = sphi 0, %s36
      %s25 = sphi 0, %s32
      %s26 = sphi 0, %s24
      %s27 = sphi 0, %s25
      %s28 = sphi 0, %s26
      %s29 = sphi 0, %s27
      %s45 = sphi 0, %s47
      %s48 = sphi 0, %s45
      %s49 = sphi 0, %s48
      %s65 = sphi 0, %s49
      %s77 = sphi 0, %s79
      %s80 = sphi 0, %s77
      %s81 = sphi 0, %s80
      %s97 = sphi 0, %s81
      %s103 = sphi 0, %s105
      %s106 = sphi 0, %s103
      %s107 = sphi 0, %s106
      %s123 = sphi 0, %s107
    $region4: #{tpu_custom_call.1} parent=1 // loop_header_branch
      %20 = sbr.rel (%p18) target = $region8
    $region5: #{tpu_custom_call.1} parent=1 // loop_body
      %s22 = ssub.s32 %s17, 1
      %s23 = ssub.s32 %s17, 2
      %s30 = sadd.s32 1, %s25
      %p31 = scmp.ge.s32.totalorder %s30, 1
      %s32 = scalar_select %p31, 0, %s30
      %s33 = sadd.s32 1, %s24
      %s34 = scalar_select %p31, %s33, %s24
      %p35 = scmp.ge.s32.totalorder %s34, 2
      %s36 = scalar_select %p35, 0, %s34
      %s37 = sadd.s32 %s24, %s25
      %p38 = scmp.lt.s32.totalorder %s37, 0
      %s39 = scalar_select %p38, %s37, 0
      %s40 = sadd.s32 %s36, %s32
      %p41 = scmp.lt.s32.totalorder %s40, 0
      %s42 = scalar_select %p41, %s40, 0
      %s43 = ssub.s32 %s39, %s42
      %p44 = scmp.eq.s32.totalorder %s43, 0
      %s46 = sadd.s32 %s45, 1
      %s47 = scalar_select %p44, %s45, %s46
      %p50 = pneg %p44
      %p51 = scmp.eq.s32.totalorder %s17, 1
      %p52 = por %p50, %p51
      %p53 = scmp.ne.s32.totalorder %s45, %s48
      %p54 = scmp.eq.s32.totalorder %s17, 0
      %p55 = por %p53, %p54
      %p56 = scmp.ne.s32.totalorder %s45, %s48
      %p57 = scmp.eq.s32.totalorder %s22, 1
      %p58 = por %p56, %p57
      %p59 = scmp.ne.s32.totalorder %s48, %s49
      %p60 = scmp.eq.s32.totalorder %s22, 0
      %p61 = por %p59, %p60
      %p62 = scmp.ne.s32.totalorder %s48, %s49
      %p63 = scmp.eq.s32.totalorder %s23, 1
      %p64 = por %p62, %p63
      %p66 = scmp.ne.s32.totalorder %s49, %s65
      %p67 = scmp.eq.s32.totalorder %s23, 0
      %p68 = por %p66, %p67
      %s69 = sadd.s32 %s24, %s25
      %p70 = scmp.lt.s32.totalorder %s69, 0
      %s71 = scalar_select %p70, %s69, 0
      %s72 = sadd.s32 %s36, %s32
      %p73 = scmp.lt.s32.totalorder %s72, 0
      %s74 = scalar_select %p73, %s72, 0
      %s75 = ssub.s32 %s71, %s74
      %p76 = scmp.eq.s32.totalorder %s75, 0
      %s78 = sadd.s32 %s77, 1
      %s79 = scalar_select %p76, %s77, %s78
      %p82 = pneg %p76
      %p83 = scmp.eq.s32.totalorder %s17, 1
      %p84 = por %p82, %p83
      %p85 = scmp.ne.s32.totalorder %s77, %s80
      %p86 = scmp.eq.s32.totalorder %s17, 0
      %p87 = por %p85, %p86
      %p88 = scmp.ne.s32.totalorder %s77, %s80
      %p89 = scmp.eq.s32.totalorder %s22, 1
      %p90 = por %p88, %p89
      %p91 = scmp.ne.s32.totalorder %s80, %s81
      %p92 = scmp.eq.s32.totalorder %s22, 0
      %p93 = por %p91, %p92
      %p94 = scmp.ne.s32.totalorder %s80, %s81
      %p95 = scmp.eq.s32.totalorder %s23, 1
      %p96 = por %p94, %p95
      %p98 = scmp.ne.s32.totalorder %s81, %s97
      %p99 = scmp.eq.s32.totalorder %s23, 0
      %p100 = por %p98, %p99
      %s101 = ssub.s32 %s24, %s36
      %p102 = scmp.eq.s32.totalorder %s101, 0
      %s104 = sadd.s32 %s103, 1
      %s105 = scalar_select %p102, %s103, %s104
      %p108 = pneg %p102
      %p109 = scmp.eq.s32.totalorder %s17, 1
      %p110 = por %p108, %p109
      %p111 = scmp.ne.s32.totalorder %s103, %s106
      %p112 = scmp.eq.s32.totalorder %s17, 0
      %p113 = por %p111, %p112
      %p114 = scmp.ne.s32.totalorder %s103, %s106
      %p115 = scmp.eq.s32.totalorder %s22, 1
      %p116 = por %p114, %p115
      %p117 = scmp.ne.s32.totalorder %s106, %s107
      %p118 = scmp.eq.s32.totalorder %s22, 0
      %p119 = por %p117, %p118
      %p120 = scmp.ne.s32.totalorder %s106, %s107
      %p121 = scmp.eq.s32.totalorder %s23, 1
      %p122 = por %p120, %p121
      %p124 = scmp.ne.s32.totalorder %s107, %s123
      %p125 = scmp.eq.s32.totalorder %s23, 0
      %p126 = por %p124, %p125
      %p127 = scmp.le.s32.totalorder 1, %s17
      %p128 = scmp.lt.s32.totalorder %s17, 3
      %p129 = pnand %p127, %p128
      %p130 = pneg %p129
      // Predicated region
      $region9: #{tpu_custom_call.1} parent=5 // pred_check
        _
      $region10: #{tpu_custom_call.1} parent=5 // pred_check_branch
        %132 = sbr.rel (%p129) target = $region12
      $region11: #{tpu_custom_call.1} parent=5 // pred_region
        %s133 = ssub.s32 %s17, 1
      $region12: #{tpu_custom_call.1} parent=5 // pred_fallthru
        _
      %p134 = scmp.lt.s32.totalorder %s17, 2
      // Predicated region
      $region13: #{tpu_custom_call.1} parent=5 // pred_check
        %p135 = pneg %p134
      $region14: #{tpu_custom_call.1} parent=5 // pred_check_branch
        %137 = sbr.rel (%p135) target = $region16
      $region15: #{tpu_custom_call.1} parent=5 // pred_region
        // Predicated region
        $region17: #{tpu_custom_call.1} parent=15 // pred_check
          %p138 = pneg %p55
        $region18: #{tpu_custom_call.1} parent=15 // pred_check_branch
          %140 = sbr.rel (%p138) target = $region20
        $region19: #{tpu_custom_call.1} parent=15 // pred_region
          %s141 = sand.u32 %s45, 1
          %s142 = scalar_lea.sflag [#allocation6], %s141
          %s143 = sand.u32 %s45, 1
          %s144 = smul.addr %s143, 32
          %s145 = scalar_lea.vmem [#allocation5], %s144
          %s146 = sadd.s32 %s24, %s25
          %p147 = scmp.lt.s32.totalorder %s146, 0
          %s148 = scalar_select %p147, %s146, 0
          %150 = vsyncadd %s142, 0
          %s151 = smul.addr %s148, 4
          %s152 = smul.addr %s151, 8
          %s153 = scalar_lea.hbm %s0, %s152
          %s155 = sshll.u32 %s153, 4
          %s156 = int_to_ptr.hbm [resolvable:$true] %s155
          %s157 = sshll.u32 %s145, 4
          %s158 = int_to_ptr.vmem [resolvable:$true] %s157
          %160 = dma.hbm_to_vmem [thread:$0]  %s156, 512, %s158, %s142
        $region20: #{tpu_custom_call.1} parent=15 // pred_fallthru
          _
        // Predicated region
        $region21: #{tpu_custom_call.1} parent=15 // pred_check
          %p161 = pneg %p87
        $region22: #{tpu_custom_call.1} parent=15 // pred_check_branch
          %163 = sbr.rel (%p161) target = $region24
        $region23: #{tpu_custom_call.1} parent=15 // pred_region
          %s164 = sand.u32 %s77, 1
          %s165 = scalar_lea.sflag [#allocation9], %s164
          %s166 = sand.u32 %s77, 1
          %s167 = smul.addr %s166, 32
          %s168 = scalar_lea.vmem [#allocation8], %s167
          %s169 = sadd.s32 %s24, %s25
          %p170 = scmp.lt.s32.totalorder %s169, 0
          %s171 = scalar_select %p170, %s169, 0
          %173 = vsyncadd %s165, 0
          %s174 = smul.addr %s171, 4
          %s175 = smul.addr %s174, 8
          %s176 = scalar_lea.hbm %s1, %s175
          %s178 = sshll.u32 %s176, 4
          %s179 = int_to_ptr.hbm [resolvable:$true] %s178
          %s180 = sshll.u32 %s168, 4
          %s181 = int_to_ptr.vmem [resolvable:$true] %s180
          %183 = dma.hbm_to_vmem [thread:$0]  %s179, 512, %s181, %s165
        $region24: #{tpu_custom_call.1} parent=15 // pred_fallthru
          _
      $region16: #{tpu_custom_call.1} parent=5 // pred_fallthru
        _
      %p184 = scmp.le.s32.totalorder 1, %s17
      %p185 = scmp.lt.s32.totalorder %s17, 3
      %p186 = pnand %p184, %p185
      %p187 = pneg %p186
      // Predicated region
      $region25: #{tpu_custom_call.1} parent=5 // pred_check
        _
      $region26: #{tpu_custom_call.1} parent=5 // pred_check_branch
        %189 = sbr.rel (%p186) target = $region28
      $region27: #{tpu_custom_call.1} parent=5 // pred_region
        %s190 = ssub.s32 %s17, 1
        %s191 = sand.u32 %s48, 1
        %s192 = scalar_lea.sflag [#allocation6], %s191
        %s193 = sand.u32 %s48, 1
        %s194 = smul.addr %s193, 32
        %s195 = scalar_lea.vmem [#allocation5], %s194
        // Predicated region
        $region29: #{tpu_custom_call.1} parent=27 // pred_check
          %p196 = pneg %p61
        $region30: #{tpu_custom_call.1} parent=27 // pred_check_branch
          %198 = sbr.rel (%p196) target = $region32
        $region31: #{tpu_custom_call.1} parent=27 // pred_region
          %200 = dma.done %s192, 512
        $region32: #{tpu_custom_call.1} parent=27 // pred_fallthru
          _
        %s201 = sand.u32 %s80, 1
        %s202 = scalar_lea.sflag [#allocation9], %s201
        %s203 = sand.u32 %s80, 1
        %s204 = smul.addr %s203, 32
        %s205 = scalar_lea.vmem [#allocation8], %s204
        // Predicated region
        $region33: #{tpu_custom_call.1} parent=27 // pred_check
          %p206 = pneg %p93
        $region34: #{tpu_custom_call.1} parent=27 // pred_check_branch
          %208 = sbr.rel (%p206) target = $region36
        $region35: #{tpu_custom_call.1} parent=27 // pred_region
          %210 = dma.done %s202, 512
        $region36: #{tpu_custom_call.1} parent=27 // pred_fallthru
          _
        %s211 = sand.u32 %s48, 1
        %s212 = scalar_lea.sflag [#allocation6], %s211
        %s213 = sand.u32 %s48, 1
        %s214 = smul.addr %s213, 32
        %s215 = scalar_lea.vmem [#allocation5], %s214
        %p216 = pneg %p61
        %p217 = pneg %p58
        %s218 = sand.u32 %s80, 1
        %s219 = scalar_lea.sflag [#allocation9], %s218
        %s220 = sand.u32 %s80, 1
        %s221 = smul.addr %s220, 32
        %s222 = scalar_lea.vmem [#allocation8], %s221
        %p223 = pneg %p93
        %p224 = pneg %p90
        %p225 = pneg %p119
        %p226 = pneg %p116
        %s227 = sand.u32 %s106, 1
        %s228 = scalar_lea.sflag [#allocation7], %s227
        %s229 = sand.u32 %s106, 1
        %s230 = scalar_lea.vmem [#allocation10], %s229
        %s231 = sadd.s32 %s26, %s27
        %p232 = scmp.lt.s32.totalorder %s231, 0
        %s233 = scalar_select %p232, %s231, 0
        %s234 = sadd.s32 %s26, %s27
        %p235 = scmp.lt.s32.totalorder %s234, 0
        %s236 = scalar_select %p235, %s234, 0
        %p237 = scmp.eq.s32.totalorder %s27, 0
        // Predicated region
        $region37: #{tpu_custom_call.1} parent=27 // pred_check
          %p238 = pneg %p237
        $region38: #{tpu_custom_call.1} parent=27 // pred_check_branch
          %240 = sbr.rel (%p238) target = $region40
        $region39: #{tpu_custom_call.1} parent=27 // pred_region
          %241 = vst [vmem:[#allocation2] sm:$0xff] 0.0
          %242 = vst [vmem:[#allocation2 + $0x8] sm:$0xff] 0.0
          %243 = vst [vmem:[#allocation2 + $0x10] sm:$0xff] 0.0
          %244 = vst [vmem:[#allocation2 + $0x18] sm:$0xff] 0.0
          %245 = vst [vmem:[#allocation3] sm:$0xff] 0.0
          %246 = vst [vmem:[#allocation3 + $0x8] sm:$0xff] 0.0
          %247 = vst [vmem:[#allocation3 + $0x10] sm:$0xff] 0.0
          %248 = vst [vmem:[#allocation3 + $0x18] sm:$0xff] 0.0
          %249 = vst [vmem:[#allocation4] sm:$0xff] 0.0
          %250 = vst [vmem:[#allocation4 + $0x8] sm:$0xff] 0.0
          %251 = vst [vmem:[#allocation4 + $0x10] sm:$0xff] 0.0
          %252 = vst [vmem:[#allocation4 + $0x18] sm:$0xff] 0.0
        $region40: #{tpu_custom_call.1} parent=27 // pred_fallthru
          _
        %s253 = sadd.s32 %s26, %s27
        %s254 = smul.u32 %s253, 8
        %v255 = vlaneseq
        %v256 = vshrl.u32 %v255, 7
        %s257 = smul.u32 0, 4
        %s258 = smul.addr %s257, 8
        %s259 = scalar_lea.vmem %s195, %s258 [#allocation5]
        %v260 = vld [vmem:[%s259] sm:$0xff]
        %v261 = vld [vmem:[%s259 + $0x8] sm:$0xff]
        %v262 = vld [vmem:[%s259 + $0x10] sm:$0xff]
        %v263 = vld [vmem:[%s259 + $0x18] sm:$0xff]
        %s264 = smul.addr %s257, 8
        %s265 = scalar_lea.vmem %s205, %s264 [#allocation8]
        %v266 = vld [vmem:[%s265] sm:$0xff]
        %v267 = vld [vmem:[%s265 + $0x8] sm:$0xff]
        %v268 = vld [vmem:[%s265 + $0x10] sm:$0xff]
        %v269 = vld [vmem:[%s265 + $0x18] sm:$0xff]
        %v270 = vsub.f32 %v260, %v266
        %v271 = vsub.f32 %v261, %v267
        %v272 = vsub.f32 %v262, %v268
        %v273 = vsub.f32 %v263, %v269
        %s274 = sadd.s32 %s254, 0
        %s275 = ssub.s32 8, %s274
        %v276 = vstv %s275
        %vm277 = vcmp.lt.s32.totalorder %v256, %v276
        %v278 = vsel %vm277, %v270, 0.0
        %v279 = vsel %vm277, %v271, 0.0
        %v280 = vsel %vm277, %v272, 0.0
        %v281 = vsel %vm277, %v273, 0.0
        %v282 = vld [vmem:[#allocation2] sm:$0xff]
        %v283 = vld [vmem:[#allocation2 + $0x8] sm:$0xff]
        %v284 = vld [vmem:[#allocation2 + $0x10] sm:$0xff]
        %v285 = vld [vmem:[#allocation2 + $0x18] sm:$0xff]
        %v286 = vmul.f32 %v278, %v278
        %v287 = vmul.f32 %v279, %v279
        %v288 = vmul.f32 %v280, %v280
        %v289 = vmul.f32 %v281, %v281
        %v290 = vadd.f32 %v282, %v286
        %v291 = vadd.f32 %v283, %v287
        %v292 = vadd.f32 %v284, %v288
        %v293 = vadd.f32 %v285, %v289
        %294 = vst [vmem:[#allocation2] sm:$0xff] %v290
        %295 = vst [vmem:[#allocation2 + $0x8] sm:$0xff] %v291
        %296 = vst [vmem:[#allocation2 + $0x10] sm:$0xff] %v292
        %297 = vst [vmem:[#allocation2 + $0x18] sm:$0xff] %v293
        %v298 = vld [vmem:[#allocation3] sm:$0xff]
        %v299 = vld [vmem:[#allocation3 + $0x8] sm:$0xff]
        %v300 = vld [vmem:[#allocation3 + $0x10] sm:$0xff]
        %v301 = vld [vmem:[#allocation3 + $0x18] sm:$0xff]
        %v302 = vand.u32 2147483647, %v278
        %v303 = vand.u32 2147483647, %v279
        %v304 = vand.u32 2147483647, %v280
        %v305 = vand.u32 2147483647, %v281
        %v306 = vadd.f32 %v298, %v302
        %v307 = vadd.f32 %v299, %v303
        %v308 = vadd.f32 %v300, %v304
        %v309 = vadd.f32 %v301, %v305
        %310 = vst [vmem:[#allocation3] sm:$0xff] %v306
        %311 = vst [vmem:[#allocation3 + $0x8] sm:$0xff] %v307
        %312 = vst [vmem:[#allocation3 + $0x10] sm:$0xff] %v308
        %313 = vst [vmem:[#allocation3 + $0x18] sm:$0xff] %v309
        %v314 = vld [vmem:[#allocation4] sm:$0xff]
        %v315 = vld [vmem:[#allocation4 + $0x8] sm:$0xff]
        %v316 = vld [vmem:[#allocation4 + $0x10] sm:$0xff]
        %v317 = vld [vmem:[#allocation4 + $0x18] sm:$0xff]
        %v318 = vadd.f32 %v314, %v278
        %v319 = vadd.f32 %v315, %v279
        %v320 = vadd.f32 %v316, %v280
        %v321 = vadd.f32 %v317, %v281
        %322 = vst [vmem:[#allocation4] sm:$0xff] %v318
        %323 = vst [vmem:[#allocation4 + $0x8] sm:$0xff] %v319
        %324 = vst [vmem:[#allocation4 + $0x10] sm:$0xff] %v320
        %325 = vst [vmem:[#allocation4 + $0x18] sm:$0xff] %v321
        // Predicated region
        $region41: #{tpu_custom_call.1} parent=27 // pred_check
          %p326 = pneg %p237
        $region42: #{tpu_custom_call.1} parent=27 // pred_check_branch
          %328 = sbr.rel (%p326) target = $region44
        $region43: #{tpu_custom_call.1} parent=27 // pred_region
          %v329 = vld [vmem:[#allocation2] sm:$0xff]
          %v330 = vld [vmem:[#allocation2 + $0x8] sm:$0xff]
          %v331 = vld [vmem:[#allocation2 + $0x10] sm:$0xff]
          %v332 = vld [vmem:[#allocation2 + $0x18] sm:$0xff]
          %v333 = vadd.f32 %v329, %v330
          %v334 = vadd.f32 %v333, %v331
          %v335 = vadd.f32 %v334, %v332
          %336 = vadd.xlane.f32.xlu0 %v335
          %v337 = vpop.xlane.xlu0 %336
          %v338 = vrot.slane %v337, 4
          %v339 = vadd.f32 %v337, %v338
          %v340 = vrot.slane %v339, 2
          %v341 = vadd.f32 %v339, %v340
          %v342 = vrot.slane %v341, 1
          %v343 = vadd.f32 %v341, %v342
          %s344 = vtos %v343
          %v345 = vld [vmem:[#allocation3] sm:$0xff]
          %v346 = vld [vmem:[#allocation3 + $0x8] sm:$0xff]
          %v347 = vld [vmem:[#allocation3 + $0x10] sm:$0xff]
          %v348 = vld [vmem:[#allocation3 + $0x18] sm:$0xff]
          %v349 = vadd.f32 %v345, %v346
          %v350 = vadd.f32 %v349, %v347
          %v351 = vadd.f32 %v350, %v348
          %352 = vadd.xlane.f32.xlu0 %v351
          %v353 = vpop.xlane.xlu0 %352
          %v354 = vrot.slane %v353, 4
          %v355 = vadd.f32 %v353, %v354
          %v356 = vrot.slane %v355, 2
          %v357 = vadd.f32 %v355, %v356
          %v358 = vrot.slane %v357, 1
          %v359 = vadd.f32 %v357, %v358
          %s360 = vtos %v359
          %v361 = vld [vmem:[#allocation4] sm:$0xff]
          %v362 = vld [vmem:[#allocation4 + $0x8] sm:$0xff]
          %v363 = vld [vmem:[#allocation4 + $0x10] sm:$0xff]
          %v364 = vld [vmem:[#allocation4 + $0x18] sm:$0xff]
          %v365 = vadd.f32 %v361, %v362
          %v366 = vadd.f32 %v365, %v363
          %v367 = vadd.f32 %v366, %v364
          %368 = vadd.xlane.f32.xlu0 %v367
          %v369 = vpop.xlane.xlu0 %368
          %v370 = vrot.slane %v369, 4
          %v371 = vadd.f32 %v369, %v370
          %v372 = vrot.slane %v371, 2
          %v373 = vadd.f32 %v371, %v372
          %v374 = vrot.slane %v373, 1
          %v375 = vadd.f32 %v373, %v374
          %s376 = vtos %v375
          %v377 = vlaneseq
          %v378 = vand.u32 %v377, 127
          %vm379 = vcmp.eq.s32.totalorder %v378, 0
          %v380 = vstv %s344
          %v381 = vsel %vm379, %v380, 0.0
          %vm382 = vcmp.eq.s32.totalorder %v378, 1
          %v383 = vstv %s360
          %v384 = vsel %vm382, %v383, 0.0
          %v385 = vadd.f32 %v381, %v384
          %vm386 = vcmp.eq.s32.totalorder %v378, 2
          %v387 = vstv %s376
          %v388 = vsel %vm386, %v387, 0.0
          %v389 = vadd.f32 %v385, %v388
          %390 = vst [vmem:[%s230] sm:$0x1] %v389
        $region44: #{tpu_custom_call.1} parent=27 // pred_fallthru
          _
        %s391 = sand.u32 %s106, 1
        %s392 = scalar_lea.sflag [#allocation7], %s391
        %s393 = sand.u32 %s106, 1
        %s394 = scalar_lea.vmem [#allocation10], %s393
        // Predicated region
        $region45: #{tpu_custom_call.1} parent=27 // pred_check
          %p395 = pneg %p116
        $region46: #{tpu_custom_call.1} parent=27 // pred_check_branch
          %397 = sbr.rel (%p395) target = $region48
        $region47: #{tpu_custom_call.1} parent=27 // pred_region
          %399 = vsyncadd %s392, 0
          %s400 = scalar_lea.hbm %s2, %s26
          %s402 = sshll.u32 %s394, 4
          %s403 = int_to_ptr.vmem [resolvable:$true] %s402
          %s404 = sshll.u32 %s400, 4
          %s405 = int_to_ptr.hbm [resolvable:$true] %s404
          %407 = dma.vmem_to_hbm [thread:$0]  %s403, 16, %s405, %s392
        $region48: #{tpu_custom_call.1} parent=27 // pred_fallthru
          _
      $region28: #{tpu_custom_call.1} parent=5 // pred_fallthru
        _
      %p408 = scmp.le.s32.totalorder 2, %s17
      // Predicated region
      $region49: #{tpu_custom_call.1} parent=5 // pred_check
        %p409 = pneg %p408
      $region50: #{tpu_custom_call.1} parent=5 // pred_check_branch
        %411 = sbr.rel (%p409) target = $region52
      $region51: #{tpu_custom_call.1} parent=5 // pred_region
        %s412 = ssub.s32 %s17, 2
        // Predicated region
        $region53: #{tpu_custom_call.1} parent=51 // pred_check
          %p413 = pneg %p122
        $region54: #{tpu_custom_call.1} parent=51 // pred_check_branch
          %415 = sbr.rel (%p413) target = $region56
        $region55: #{tpu_custom_call.1} parent=51 // pred_region
          %s416 = sand.u32 %s107, 1
          %s417 = scalar_lea.sflag [#allocation7], %s416
          %s418 = sand.u32 %s107, 1
          %s419 = scalar_lea.vmem [#allocation10], %s418
          %421 = dma.done %s417, 16
        $region56: #{tpu_custom_call.1} parent=51 // pred_fallthru
          _
      $region52: #{tpu_custom_call.1} parent=5 // pred_fallthru
        _
    $region6: #{tpu_custom_call.1} parent=1 // loop_footer
      %s21 = sadd.s32 1, %s17
    $region7: #{tpu_custom_call.1} parent=1 // loop_footer_branch
      %16 = sbr.rel target = $region3
    $region8: #{tpu_custom_call.1} parent=1 // loop_exit
      _
    %422 = vsyncpa [#allocation6], 1
    %s423 = scalar_lea.sflag [#allocation6], 1
    %424 = vsyncpa %s423, 1
    %425 = vsyncpa [#allocation9], 1
    %s426 = scalar_lea.sflag [#allocation9], 1
    %427 = vsyncpa %s426, 1
    %428 = vsyncpa [#allocation7], 1
    %s429 = scalar_lea.sflag [#allocation7], 1
    %430 = vsyncpa %s429, 1

</llo_original>
